<compile_context>
chip_gen: v6e
topology: v6e:2x2x1
jax: 0.10.0
libtpu: 0.0.40
codegen_flags: <defaults>
</compile_context>

<pallas_src>
import jax
import jax.numpy as jnp
from jax import lax
from jax.experimental import pallas as pl
from jax.experimental.pallas import tpu as pltpu

_VMEM_LIMIT_BYTES = 48 * 1024 * 1024   # explicit scoped-VMEM budget (< v7x 64 MiB)
_T_SUB = 8                             # scan output-slab length (sublane-dense stores)


# ----------------------------------------------------------------------------
# helpers
# ----------------------------------------------------------------------------
def _tile(dim: int, preferred: int, aligns) -> int:
    """Largest aligned tile <= `preferred` that divides `dim`, else full dim."""
    if dim <= preferred:
        return dim
    for align in aligns:
        t = (preferred // align) * align
        while t >= align:
            if dim % t == 0:
                return t
            t -= align
    return dim


def _choose_lc(seq: int, pref: int) -> int:
    """Sequence-chunk length for the scan.  Full seq if small; otherwise a
    128-multiple divisor (keeps the (B, N, L) B/C blocks lane-legal); else
    fall back to the full sequence."""
    if seq <= pref:
        return seq
    t = (pref // 128) * 128
    while t >= 128:
        if seq % t == 0:
            return t
        t -= 128
    return seq


# ----------------------------------------------------------------------------
# 1. Tiled matmul (+ bias) kernel  — in_proj / fused x_proj+dt_proj / out_proj
# ----------------------------------------------------------------------------
def _linear_kernel(a_ref, b_ref, bias_ref, o_ref, acc_ref):
    @pl.when(pl.program_id(2) == 0)
    def _():
        acc_ref[...] = jnp.zeros_like(acc_ref)

    # Native-dtype operands straight to the MXU (bf16 stays bf16), f32 accumulate.
    acc_ref[...] += jnp.dot(a_ref[...], b_ref[...],
                            preferred_element_type=jnp.float32)

    @pl.when(pl.program_id(2) == pl.num_programs(2) - 1)
    def _():
        o_ref[...] = (acc_ref[...] + bias_ref[...]).astype(o_ref.dtype)


def linear(a, w, bias=None, *, tm_pref=256, tn_pref=512, tk_pref=512):
    m, k = a.shape
    k2, n = w.shape
    assert k == k2
    if bias is None:
        bias = jnp.zeros((1, n), jnp.float32)
    else:
        bias = bias.reshape(1, n).astype(jnp.float32)

    tm = _tile(m, tm_pref, (128, 8))
    tn = _tile(n, tn_pref, (256, 128))
    tk = _tile(k, tk_pref, (256, 128))
    grid = (m // tm, n // tn, k // tk)

    return pl.pallas_call(
        _linear_kernel,
        out_shape=jax.ShapeDtypeStruct((m, n), a.dtype),
        grid_spec=pltpu.PrefetchScalarGridSpec(
            num_scalar_prefetch=0,
            grid=grid,
            in_specs=[
                pl.BlockSpec((tm, tk), lambda i, j, kk: (i, kk)),
                pl.BlockSpec((tk, tn), lambda i, j, kk: (kk, j)),
                pl.BlockSpec((1, tn), lambda i, j, kk: (0, j)),
            ],
            out_specs=pl.BlockSpec((tm, tn), lambda i, j, kk: (i, j)),
            scratch_shapes=[pltpu.VMEM((tm, tn), jnp.float32)],
        ),
        compiler_params=pltpu.CompilerParams(
            dimension_semantics=("parallel", "parallel", "arbitrary"),
            vmem_limit_bytes=_VMEM_LIMIT_BYTES),
    )(a, w, bias)


# ----------------------------------------------------------------------------
# 2. Depthwise causal conv1d + bias + SiLU (chomp + left padding fused away)
# ----------------------------------------------------------------------------
def _causal_conv_silu_kernel(x_ref, w_ref, b_ref, o_ref):
    # x_ref/o_ref: (1, L, dc); w_ref: (K, dc); causal left padding handled here.
    seq = o_ref.shape[1]
    ksz = w_ref.shape[0]
    xb = x_ref[0].astype(jnp.float32)                               # (L, dc)
    dc = xb.shape[1]

    acc = b_ref[...].astype(jnp.float32) + w_ref[ksz - 1:ksz, :].astype(jnp.float32) * xb
    for j in range(1, ksz):                     # d_conv is tiny (4): fully unrolled
        shifted = jnp.concatenate(
            [jnp.zeros((j, dc), jnp.float32), xb[:seq - j, :]], axis=0)
        acc = acc + w_ref[ksz - 1 - j:ksz - j, :].astype(jnp.float32) * shifted
    o_ref[0] = (acc * jax.nn.sigmoid(acc)).astype(o_ref.dtype)


def causal_conv_silu(x, w, b, *, dc_pref=512):
    bsz, seq, d = x.shape
    k = w.shape[0]
    dc = _tile(d, dc_pref, (128,))
    grid = (bsz, d // dc)
    return pl.pallas_call(
        _causal_conv_silu_kernel,
        out_shape=jax.ShapeDtypeStruct((bsz, seq, d), x.dtype),
        grid_spec=pltpu.PrefetchScalarGridSpec(
            num_scalar_prefetch=0,
            grid=grid,
            in_specs=[
                pl.BlockSpec((1, seq, dc), lambda bi, j: (bi, 0, j)),
                pl.BlockSpec((k, dc), lambda bi, j: (0, j)),
                pl.BlockSpec((1, dc), lambda bi, j: (0, j)),
            ],
            out_specs=pl.BlockSpec((1, seq, dc), lambda bi, j: (bi, 0, j)),
        ),
        compiler_params=pltpu.CompilerParams(
            dimension_semantics=("parallel", "parallel"),
            vmem_limit_bytes=_VMEM_LIMIT_BYTES),
    )(x, w, b.reshape(1, d))


# ----------------------------------------------------------------------------
# 3. Selective scan (fused softplus + recurrence + D skip + SiLU(z) gate)
# ----------------------------------------------------------------------------
def _selective_scan_kernel(x_ref, dr_ref, bt_ref, ct_ref, a_ref, d_ref, z_ref,
                           y_ref, h_ref):
    n_state, dc = h_ref.shape
    lc = y_ref.shape[1]

    @pl.when(pl.program_id(2) == 0)          # fresh state for every (b, d-chunk)
    def _():
        h_ref[...] = jnp.zeros_like(h_ref)

    a_neg = a_ref[...]                                   # (N, dc)   = -exp(A_log)^T
    d_row = d_ref[...]                                   # (1, dc)

    # ---- hoisted, fully vectorized elementwise work over the whole block ----
    x_blk = x_ref[0].astype(jnp.float32)                 # (lc, dc)
    dr = dr_ref[0].astype(jnp.float32)                   # (lc, dc)
    z_blk = z_ref[0].astype(jnp.float32)                 # (lc, dc)
    bt = bt_ref[0].astype(jnp.float32)                   # (N, lc)  time on lanes
    ct = ct_ref[0].astype(jnp.float32)                   # (N, lc)

    delta = jnp.maximum(dr, 0.0) + jnp.log(1.0 + jnp.exp(-jnp.abs(dr)))  # softplus
    dx = delta * x_blk                                   # delta_t * x_t
    gate = z_blk * jax.nn.sigmoid(z_blk)                 # SiLU(z)
    skip = d_row * x_blk                                 # D * x

    h = h_ref[...]                                       # (N, dc)

    # ---- serial recurrence: statically unrolled, stores grouped into dense
    #      (T_SUB, dc) slabs so every vst is sublane/lane dense ----
    for s0 in range(0, lc, _T_SUB):
        ts = min(_T_SUB, lc - s0)
        ys = []
        for i in range(ts):
            t = s0 + i
            da_t = jnp.exp(a_neg * delta[t:t + 1, :])            # (N, dc) EUP
            bx_t = bt[:, t:t + 1] * dx[t:t + 1, :]               # (N,1)x(1,dc) outer (VPU)
            h = da_t * h + bx_t                                  # recurrence (VPU)
            ys.append(jnp.sum(ct[:, t:t + 1] * h, axis=0, keepdims=True))  # (1, dc) XLU
        y_slab = jnp.concatenate(ys, axis=0) if ts > 1 else ys[0]
        y_ref[0, s0:s0 + ts, :] = ((y_slab + skip[s0:s0 + ts, :])
                                   * gate[s0:s0 + ts, :]).astype(y_ref.dtype)

    h_ref[...] = h


def selective_scan(x, delta_raw, b_t, c_t, a_neg_t, d_vec, z,
                   *, lc_pref=128, dc_pref=512):
    bsz, seq, d_in = x.shape
    n_state = b_t.shape[1]
    lc = _choose_lc(seq, lc_pref)
    dc = _tile(d_in, dc_pref, (128,))
    grid = (bsz, d_in // dc, seq // lc)

    return pl.pallas_call(
        _selective_scan_kernel,
        out_shape=jax.ShapeDtypeStruct((bsz, seq, d_in), x.dtype),
        grid_spec=pltpu.PrefetchScalarGridSpec(
            num_scalar_prefetch=0,
            grid=grid,
            in_specs=[
                pl.BlockSpec((1, lc, dc), lambda b, j, l: (b, l, j)),        # x (post conv+silu)
                pl.BlockSpec((1, lc, dc), lambda b, j, l: (b, l, j)),        # delta (pre-softplus)
                pl.BlockSpec((1, n_state, lc), lambda b, j, l: (b, 0, l)),   # B^T  (B, N, L)
                pl.BlockSpec((1, n_state, lc), lambda b, j, l: (b, 0, l)),   # C^T  (B, N, L)
                pl.BlockSpec((n_state, dc), lambda b, j, l: (0, j)),         # -exp(A_log)^T
                pl.BlockSpec((1, dc), lambda b, j, l: (0, j)),               # D
                pl.BlockSpec((1, lc, dc), lambda b, j, l: (b, l, j)),        # z (gate)
            ],
            out_specs=pl.BlockSpec((1, lc, dc), lambda b, j, l: (b, l, j)),
            scratch_shapes=[pltpu.VMEM((n_state, dc), jnp.float32)],         # h state
        ),
        compiler_params=pltpu.CompilerParams(
            dimension_semantics=("parallel", "parallel", "arbitrary"),
            vmem_limit_bytes=_VMEM_LIMIT_BYTES),
    )(x, delta_raw, b_t, c_t,
      a_neg_t.astype(jnp.float32),
      d_vec.reshape(1, d_in).astype(jnp.float32), z)


# ----------------------------------------------------------------------------
# MambaBlock forward (Pallas kernels + thin JAX glue for splits/reshapes)
# ----------------------------------------------------------------------------
def mamba_block_forward(x, p):
    bsz, seq, d_model = x.shape
    d_in = p["w_in"].shape[1] // 2
    n_state = p["A_log"].shape[1]
    dt_rank = p["w_dt"].shape[0]

    x2d = x.reshape(bsz * seq, d_model)
    xz = linear(x2d, p["w_in"])                                   # in_proj
    xr = xz[:, :d_in].reshape(bsz, seq, d_in)
    z = xz[:, d_in:].reshape(bsz, seq, d_in)

    xc = causal_conv_silu(xr, p["conv_w"], p["conv_b"])           # conv1d[:L] + SiLU

    # dt_proj folded into x_proj:  dt_proj(x_proj_dt(xc)) == xc @ (Wx_dt @ Wdt) + b
    # (tiny parameter-only composition done once in JAX).
    w_delta = p["w_x"][:, :dt_rank] @ p["w_dt"]                   # (d_in, d_in)
    w_cat = jnp.concatenate([w_delta, p["w_x"][:, dt_rank:]], axis=1)
    bias_cat = jnp.concatenate(
        [p["dt_bias"], jnp.zeros((2 * n_state,), p["dt_bias"].dtype)])

    dbc = linear(xc.reshape(bsz * seq, d_in), w_cat, bias=bias_cat)
    delta_raw = dbc[:, :d_in].reshape(bsz, seq, d_in)             # pre-softplus delta
    bmat = dbc[:, d_in:d_in + n_state].reshape(bsz, seq, n_state)
    cmat = dbc[:, d_in + n_state:].reshape(bsz, seq, n_state)

    # B/C transposed to (B, N, L): per-timestep columns become static lane slices.
    b_t = jnp.swapaxes(bmat, 1, 2)
    c_t = jnp.swapaxes(cmat, 1, 2)
    a_neg_t = -jnp.exp(p["A_log"].astype(jnp.float32)).T          # (N, d_in)

    y = selective_scan(xc, delta_raw, b_t, c_t, a_neg_t, p["D"], z)

    out = linear(y.reshape(bsz * seq, d_in), p["w_out"])          # out_proj
    return out.reshape(bsz, seq, d_model)


# ----------------------------------------------------------------------------
# Pure-JAX reference (mirrors the PyTorch module math exactly)
# ----------------------------------------------------------------------------
def mamba_block_reference(x, p):
    d_in = p["w_in"].shape[1] // 2
    n_state = p["A_log"].shape[1]
    dt_rank = p["w_dt"].shape[0]
    d_conv = p["conv_w"].shape[0]
    bsz, seq, _ = x.shape

    xz = x @ p["w_in"]
    xr, z = xz[..., :d_in], xz[..., d_in:]
    xpad = jnp.pad(xr, ((0, 0), (d_conv - 1, 0), (0, 0)))
    xc = sum(p["conv_w"][k] * xpad[:, k:k + seq, :] for k in range(d_conv)) + p["conv_b"]
    xc = xc * jax.nn.sigmoid(xc)

    dbc = xc @ p["w_x"]
    dt = dbc[..., :dt_rank]
    bmat = dbc[..., dt_rank:dt_rank + n_state]
    cmat = dbc[..., dt_rank + n_state:]
    delta = jax.nn.softplus(dt @ p["w_dt"] + p["dt_bias"])

    a = -jnp.exp(p["A_log"])                                      # (d_in, N)
    delta_a = jnp.exp(delta[..., None] * a)                       # (B, L, d_in, N)
    bx = (delta * xc)[..., None] * bmat[:, :, None, :]

    def step(h, inp):
        da_t, bx_t = inp
        h = da_t * h + bx_t
        return h, h

    h0 = jnp.zeros((bsz, d_in, n_state), jnp.float32)
    _, hs = lax.scan(step, h0, (jnp.swapaxes(delta_a, 0, 1), jnp.swapaxes(bx, 0, 1)))
    hs = jnp.swapaxes(hs, 0, 1)                                   # (B, L, d_in, N)
    y = jnp.einsum("blin,bln->bli", hs, cmat) + p["D"] * xc
    out = (y * (z * jax.nn.sigmoid(z))) @ p["w_out"]
    return out


# ----------------------------------------------------------------------------
if __name__ == "__main__":
    key = jax.random.PRNGKey(0)

    # MambaConfig(d_model=32): d_inner = 64, dt_rank = ceil(32/16) = 2,
    # d_state = 16, d_conv = 4.  Batch = 2, seq len = 16.
    d_model, d_state, d_conv, expand = 32, 16, 4, 2
    d_inner = expand * d_model
    dt_rank = -(-d_model // 16)
    bsz, seq = 2, 16

    ks = jax.random.split(key, 8)
    x = jax.random.normal(ks[0], (bsz, seq, d_model), jnp.float32)

    def _scale(fan_in):
        return 1.0 / jnp.sqrt(jnp.float32(fan_in))

    dt = jnp.exp(jax.random.uniform(ks[6], (d_inner,), jnp.float32)
                 * (jnp.log(0.1) - jnp.log(0.001)) + jnp.log(0.001))
    dt = jnp.maximum(dt, 1e-4)

    params = {
        "w_in":   jax.random.normal(ks[1], (d_model, 2 * d_inner), jnp.float32) * _scale(d_model),
        "conv_w": jax.random.normal(ks[2], (d_conv, d_inner), jnp.float32) * _scale(d_conv),
        "conv_b": jax.random.normal(ks[3], (d_inner,), jnp.float32) * 0.1,
        "w_x":    jax.random.normal(ks[4], (d_inner, dt_rank + 2 * d_state), jnp.float32) * _scale(d_inner),
        "w_dt":   jax.random.uniform(ks[5], (dt_rank, d_inner), jnp.float32,
                                     -(dt_rank ** -0.5), dt_rank ** -0.5),
        "dt_bias": dt + jnp.log(-jnp.expm1(-dt)),
        "A_log":  jnp.log(jnp.tile(jnp.arange(1, d_state + 1, dtype=jnp.float32), (d_inner, 1))),
        "D":      jnp.ones((d_inner,), jnp.float32),
        "w_out":  jax.random.normal(ks[7], (d_inner, d_model), jnp.float32) * _scale(d_inner),
    }

    y = mamba_block_forward(x, params)
    y = jax.block_until_ready(y)

    y_ref = mamba_block_reference(x, params)
    assert y.shape == (bsz, seq, d_model), y.shape
    err = float(jnp.max(jnp.abs(y - y_ref)))
    assert jnp.allclose(y, y_ref, atol=1e-3, rtol=1e-3), err

    print("KERNEL_OK")
</pallas_src>

<mosaic_0001>
module attributes {stable_mosaic.version = 11 : i64} {
  func.func @_linear_kernel(%arg0: i32, %arg1: i32, %arg2: i32, %arg3: memref<32x32xf32, #tpu.memory_space<vmem>>, %arg4: memref<32x128xf32, #tpu.memory_space<vmem>>, %arg5: memref<1x128xf32, #tpu.memory_space<vmem>>, %arg6: memref<32x128xf32, #tpu.memory_space<vmem>>, %arg7: memref<32x128xf32, #tpu.memory_space<vmem>>) attributes {dimension_semantics = [#tpu.dimension_semantics<parallel>, #tpu.dimension_semantics<parallel>, #tpu.dimension_semantics<arbitrary>], iteration_bounds = array<i64: 1, 1, 1>, scalar_prefetch = 0 : i64, scratch_operands = 1 : i64, tpu.core_type = #tpu.core_type<tc>, window_params = [{transform_indices = @transform_0, window_bounds = array<i64: 32, 32>}, {transform_indices = @transform_1, window_bounds = array<i64: 32, 128>}, {transform_indices = @transform_2, window_bounds = array<i64: 1, 128>}, {transform_indices = @transform_3, window_bounds = array<i64: 32, 128>}]} {
    %c0_i32 = arith.constant 0 : i32
    %0 = arith.cmpi eq, %arg2, %c0_i32 : i32
    %1 = arith.extui %0 : i1 to i32
    %c0_i32_0 = arith.constant 0 : i32
    %2 = arith.cmpi ne, %1, %c0_i32_0 : i32
    scf.if %2 {
      %cst_10 = arith.constant 0.000000e+00 : f32
      %12 = vector.broadcast %cst_10 : f32 to vector<32x128xf32>
      %c0_11 = arith.constant 0 : index
      %c0_12 = arith.constant 0 : index
      %13 = vector.load %arg7[%c0_11, %c0_12] : memref<32x128xf32, #tpu.memory_space<vmem>>, vector<32x128xf32>
      tpu.vector_store %arg7[%c0_11, %c0_12], %12 {strides = array<i32>} : memref<32x128xf32, #tpu.memory_space<vmem>>, vector<32x128xf32>,
    } else {
    }
    %c0 = arith.constant 0 : index
    %c0_1 = arith.constant 0 : index
    %3 = vector.load %arg7[%c0, %c0_1] : memref<32x128xf32, #tpu.memory_space<vmem>>, vector<32x128xf32>
    %c0_2 = arith.constant 0 : index
    %c0_3 = arith.constant 0 : index
    %4 = vector.load %arg3[%c0_2, %c0_3] : memref<32x32xf32, #tpu.memory_space<vmem>>, vector<32x32xf32>
    %c0_4 = arith.constant 0 : index
    %c0_5 = arith.constant 0 : index
    %5 = vector.load %arg4[%c0_4, %c0_5] : memref<32x128xf32, #tpu.memory_space<vmem>>, vector<32x128xf32>
    %cst = arith.constant dense<0.000000e+00> : vector<32x128xf32>
    %6 = tpu.matmul %4, %5, %cst {dimension_numbers = #tpu.dot_dimension_numbers<[1], [0], [0], [1], [0, 0, 1, 1], [], []>} : vector<32x32xf32>, vector<32x128xf32>, vector<32x128xf32> -> vector<32x128xf32>
    %7 = arith.addf %3, %6 : vector<32x128xf32>
    %c0_6 = arith.constant 0 : index
    %c0_7 = arith.constant 0 : index
    %8 = vector.load %arg7[%c0_6, %c0_7] : memref<32x128xf32, #tpu.memory_space<vmem>>, vector<32x128xf32>
    tpu.vector_store %arg7[%c0_6, %c0_7], %7 {strides = array<i32>} : memref<32x128xf32, #tpu.memory_space<vmem>>, vector<32x128xf32>,
    %c0_i32_8 = arith.constant 0 : i32
    %9 = arith.cmpi eq, %arg2, %c0_i32_8 : i32
    %10 = arith.extui %9 : i1 to i32
    %c0_i32_9 = arith.constant 0 : i32
    %11 = arith.cmpi ne, %10, %c0_i32_9 : i32
    scf.if %11 {
      %c0_10 = arith.constant 0 : index
      %c0_11 = arith.constant 0 : index
      %12 = vector.load %arg7[%c0_10, %c0_11] : memref<32x128xf32, #tpu.memory_space<vmem>>, vector<32x128xf32>
      %c0_12 = arith.constant 0 : index
      %c0_13 = arith.constant 0 : index
      %13 = vector.load %arg5[%c0_12, %c0_13] : memref<1x128xf32, #tpu.memory_space<vmem>>, vector<1x128xf32>
      %14 = vector.broadcast %13 : vector<1x128xf32> to vector<32x128xf32>
      %15 = arith.addf %12, %14 : vector<32x128xf32>
      %c0_14 = arith.constant 0 : index
      %c0_15 = arith.constant 0 : index
      %16 = vector.load %arg6[%c0_14, %c0_15] : memref<32x128xf32, #tpu.memory_space<vmem>>, vector<32x128xf32>
      tpu.vector_store %arg6[%c0_14, %c0_15], %15 {strides = array<i32>} : memref<32x128xf32, #tpu.memory_space<vmem>>, vector<32x128xf32>,
    } else {
    }
    return
  }
  func.func @transform_0(%arg0: i32, %arg1: i32, %arg2: i32) -> (i32, i32) {
    %c0_i32 = arith.constant 0 : i32
    return %arg0, %arg2 : i32, i32
  }
  func.func @transform_1(%arg0: i32, %arg1: i32, %arg2: i32) -> (i32, i32) {
    %c0_i32 = arith.constant 0 : i32
    return %arg2, %arg1 : i32, i32
  }
  func.func @transform_2(%arg0: i32, %arg1: i32, %arg2: i32) -> (i32, i32) {
    %c0_i32 = arith.constant 0 : i32
    %c0_i32_0 = arith.constant 0 : i32
    return %c0_i32, %arg1 : i32, i32
  }
  func.func @transform_3(%arg0: i32, %arg1: i32, %arg2: i32) -> (i32, i32) {
    %c0_i32 = arith.constant 0 : i32
    return %arg0, %arg1 : i32, i32
  }
}

</mosaic_0001>

<llo_original>
// kernel: tpu_custom_call.1
$region0: #{tpu_custom_call.1}
  #allocation0 [shape = 'u32[]', space=smem, size = 0x4, offset = 0x4, fixed_abs, tag = 'smem constant byte address 0x4 - core index']
  #allocation1 [shape = 'u32[144,128]{1,0:T(1,128)}', space=vmem, size = 0x12000, scoped, tag = 'internal scratch']
  #allocation2 [shape = 'f32[32,128]{1,0:T(8,128)}', space=vmem, size = 0x4000, scoped, tag = 'scratch operand']
  %s0 = inlined_call_operand.hbm [shape: f32[32,32], index: 0, kind: input, shape index: {}]
  %s1 = inlined_call_operand.hbm [shape: f32[32,128], index: 1, kind: input, shape index: {}]
  %s2 = inlined_call_operand.vmem [shape: f32[1,128], index: 2, kind: input, shape index: {}]
  %s3 = inlined_call_operand.hbm [shape: f32[32,128], index: 3, kind: output, shape index: {}]
  %s4 = sld [smem:[#allocation0]]
  $region38: #{tpu_custom_call.1} parent=0
    _
  %s6 = ssub.s32 1, %s4
  %s7 = scalar_select 0, %s6, %s4
  $region1: #{tpu_custom_call.1} parent=0
    #allocation3 [shape = 'u8[16384]{0}', space=vmem, size = 0x4000, scoped, tag = 'input window, operand 0, single buffered']
    #allocation4 [shape = 's32[1]{0}', space=sflag, size = 0x4, scoped, tag = 'scoped memory for tpu_custom_call.1']
    #allocation5 [shape = 's32[1]{0}', space=sflag, size = 0x4, scoped, tag = 'scoped memory for tpu_custom_call.1']
    #allocation6 [shape = 'u8[16384]{0}', space=vmem, size = 0x4000, scoped, tag = 'input window, operand 1, single buffered']
    #allocation7 [shape = 's32[1]{0}', space=sflag, size = 0x4, scoped, tag = 'scoped memory for tpu_custom_call.1']
    #allocation8 [shape = 'u8[16384]{0}', space=vmem, size = 0x4000, scoped, tag = 'output window, operand 0, single buffered']
    %8 = vsyncpa [#allocation4], 0
    %9 = vsyncpa [#allocation7], 0
    %10 = vsyncpa [#allocation5], 0
    // Predicated region
    $region2: #{tpu_custom_call.1} parent=1 // pred_check
      _
    $region3: #{tpu_custom_call.1} parent=1 // pred_check_branch
      %12 = sbr.rel (0) target = $region5
    $region4: #{tpu_custom_call.1} parent=1 // pred_region
      %s14 = ssub.s32 512, 512
      %15 = vsyncadd [#allocation4], %s14
      %s16 = sshll.u32 [#allocation3], 4
      %s17 = int_to_ptr.vmem [resolvable:$true] %s16
      %22 = dma.hbm_to_vmem [thread:$0]  %s0, 512, %s17, [#allocation4], 128, 128, 8
    $region5: #{tpu_custom_call.1} parent=1 // pred_fallthru
      _
    // Predicated region
    $region6: #{tpu_custom_call.1} parent=1 // pred_check
      _
    $region7: #{tpu_custom_call.1} parent=1 // pred_check_branch
      %24 = sbr.rel (0) target = $region9
    $region8: #{tpu_custom_call.1} parent=1 // pred_region
      %s26 = ssub.s32 512, 512
      %27 = vsyncadd [#allocation7], %s26
      %s28 = sshll.u32 [#allocation6], 4
      %s29 = int_to_ptr.vmem [resolvable:$true] %s28
      %34 = dma.hbm_to_vmem [thread:$0]  %s1, 512, %s29, [#allocation7], 128, 128, 8
    $region9: #{tpu_custom_call.1} parent=1 // pred_fallthru
      _
    // Predicated region
    $region10: #{tpu_custom_call.1} parent=1 // pred_check
      _
    $region11: #{tpu_custom_call.1} parent=1 // pred_check_branch
      %36 = sbr.rel (0) target = $region13
    $region12: #{tpu_custom_call.1} parent=1 // pred_region
      _
    $region13: #{tpu_custom_call.1} parent=1 // pred_fallthru
      _
    // Predicated region
    $region14: #{tpu_custom_call.1} parent=1 // pred_check
      _
    $region15: #{tpu_custom_call.1} parent=1 // pred_check_branch
      %38 = sbr.rel (0) target = $region17
    $region16: #{tpu_custom_call.1} parent=1 // pred_region
      %39 = dma.done [#allocation4], 512
    $region17: #{tpu_custom_call.1} parent=1 // pred_fallthru
      _
    // Predicated region
    $region18: #{tpu_custom_call.1} parent=1 // pred_check
      _
    $region19: #{tpu_custom_call.1} parent=1 // pred_check_branch
      %41 = sbr.rel (0) target = $region21
    $region20: #{tpu_custom_call.1} parent=1 // pred_region
      %42 = dma.done [#allocation7], 512
    $region21: #{tpu_custom_call.1} parent=1 // pred_fallthru
      _
    %p43 = scmp.eq.s32.totalorder 0, 0
    // Predicated region
    $region22: #{tpu_custom_call.1} parent=1 // pred_check
      %p44 = pneg %p43
    $region23: #{tpu_custom_call.1} parent=1 // pred_check_branch
      %46 = sbr.rel (%p44) target = $region25
    $region24: #{tpu_custom_call.1} parent=1 // pred_region
      %47 = vst [vmem:[#allocation2] sm:$0xff] 0.0
      %48 = vst [vmem:[#allocation2 + $0x8] sm:$0xff] 0.0
      %49 = vst [vmem:[#allocation2 + $0x10] sm:$0xff] 0.0
      %50 = vst [vmem:[#allocation2 + $0x18] sm:$0xff] 0.0
    $region25: #{tpu_custom_call.1} parent=1 // pred_fallthru
      _
    %v51 = vld [vmem:[#allocation2] sm:$0xff]
    %v52 = vld [vmem:[#allocation2 + $0x8] sm:$0xff]
    %v53 = vld [vmem:[#allocation2 + $0x10] sm:$0xff]
    %v54 = vld [vmem:[#allocation2 + $0x18] sm:$0xff]
    %v55 = vld [vmem:[#allocation3] sm:$0xff]
    %v56 = vld [vmem:[#allocation3 + $0x8] sm:$0xff]
    %v57 = vld [vmem:[#allocation3 + $0x10] sm:$0xff]
    %v58 = vld [vmem:[#allocation3 + $0x18] sm:$0xff]
    %v59 = vld [vmem:[#allocation6] sm:$0xff]
    %v60 = vld [vmem:[#allocation6 + $0x8] sm:$0xff]
    %v61 = vld [vmem:[#allocation6 + $0x10] sm:$0xff]
    %v62 = vld [vmem:[#allocation6 + $0x18] sm:$0xff]
    %vm63 = vcmask 261120
    %v65 = vsel %vm63, %v55, 0
    %v68 = vsel %vm63, %v56, 0
    %v71 = vsel %vm63, %v57, 0
    %v74 = vsel %vm63, %v58, 0
    %76 = vmatprep.subr.mxu0 0.0
    %77 = vmatpush1.msra.mxu0 0.0
    %78 = vmatprep.subr.mxu0 0.0
    %79 = vmatpush1.msra.mxu0 0.0
    %80 = vmatprep.subr.mxu0 0.0
    %81 = vmatpush1.msra.mxu0 0.0
    %82 = vmatprep.subr.mxu0 0.0
    %83 = vmatpush1.msra.mxu0 0.0
    %84 = vmatprep.subr.mxu0 0.0
    %85 = vmatpush1.msra.mxu0 0.0
    %86 = vmatprep.subr.mxu0 0.0
    %87 = vmatpush1.msra.mxu0 0.0
    %88 = vmatprep.subr.mxu0 0.0
    %89 = vmatpush1.msra.mxu0 0.0
    %90 = vmatprep.subr.mxu0 0.0
    %91 = vmatpush1.msra.mxu0 0.0
    %92 = vmatprep.subr.mxu0 0.0
    %93 = vmatpush1.msra.mxu0 0.0
    %94 = vmatprep.subr.mxu0 0.0
    %95 = vmatpush1.msra.mxu0 0.0
    %96 = vmatprep.subr.mxu0 0.0
    %97 = vmatpush1.msra.mxu0 0.0
    %98 = vmatprep.subr.mxu0 0.0
    %99 = vmatpush1.msra.mxu0 0.0
    %100 = vmatprep.subr.mxu0 0.0
    %101 = vmatpush1.msra.mxu0 %v62
    %102 = vmatprep.subr.mxu0 0.0
    %103 = vmatpush1.msra.mxu0 %v61
    %104 = vmatprep.subr.mxu0 0.0
    %105 = vmatpush1.msra.mxu0 %v60
    %106 = vmatprep.subr.mxu0 0.0
    %107 = vmatpush1.msra.mxu0 %v59
    %108 = vmatprep.subr.mxu0 0.0
    %109 = vmatpush2.msra.mxu0 0.0
    %110 = vmatprep.subr.mxu0 0.0
    %111 = vmatpush2.msra.mxu0 0.0
    %112 = vmatprep.subr.mxu0 0.0
    %113 = vmatpush2.msra.mxu0 0.0
    %114 = vmatprep.subr.mxu0 0.0
    %115 = vmatpush2.msra.mxu0 0.0
    %116 = vmatprep.subr.mxu0 0.0
    %117 = vmatpush2.msra.mxu0 0.0
    %118 = vmatprep.subr.mxu0 0.0
    %119 = vmatpush2.msra.mxu0 0.0
    %120 = vmatprep.subr.mxu0 0.0
    %121 = vmatpush2.msra.mxu0 0.0
    %122 = vmatprep.subr.mxu0 0.0
    %123 = vmatpush2.msra.mxu0 0.0
    %124 = vmatprep.subr.mxu0 0.0
    %125 = vmatpush2.msra.mxu0 0.0
    %126 = vmatprep.subr.mxu0 0.0
    %127 = vmatpush2.msra.mxu0 0.0
    %128 = vmatprep.subr.mxu0 0.0
    %129 = vmatpush2.msra.mxu0 0.0
    %130 = vmatprep.subr.mxu0 0.0
    %131 = vmatpush2.msra.mxu0 0.0
    %132 = vmatprep.subr.mxu0 0.0
    %133 = vmatpush2.msra.mxu0 0.0
    %134 = vmatprep.subr.mxu0 0.0
    %135 = vmatpush2.msra.mxu0 0.0
    %136 = vmatprep.subr.mxu0 0.0
    %137 = vmatpush2.msra.mxu0 0.0
    %138 = vmatprep.subr.mxu0 0.0
    %139 = vmatpush2.msra.mxu0 0.0
    %140 = vmatprep.mubr.f32.mxu0 0.0
    %141 = vmatmul.mubr.f32.gmra.mxu0 %v65
    %v142 = vpop.f32.mrf.mxu0
    %v143 = vadd.f32 0.0, %v142
    %v144 = vpop.f32.mrf.mxu0
    %145 = vmatprep.mubr.f32.mxu0 0.0
    %146 = vmatmul.mubr.f32.gmra.mxu0 %v68
    %v147 = vpop.f32.mrf.mxu0
    %v148 = vadd.f32 0.0, %v147
    %v149 = vpop.f32.mrf.mxu0
    %150 = vmatprep.mubr.f32.mxu0 0.0
    %151 = vmatmul.mubr.f32.gmra.mxu0 %v71
    %v152 = vpop.f32.mrf.mxu0
    %v153 = vadd.f32 0.0, %v152
    %v154 = vpop.f32.mrf.mxu0
    %155 = vmatprep.mubr.f32.mxu0 0.0
    %156 = vmatmul.mubr.f32.gmra.mxu0 %v74
    %v157 = vpop.f32.mrf.mxu0
    %v158 = vadd.f32 0.0, %v157
    %v159 = vpop.f32.mrf.mxu0
    %160 = vdwg.mxu0
    %v161 = vadd.f32 %v51, %v143
    %v162 = vadd.f32 %v52, %v148
    %v163 = vadd.f32 %v53, %v153
    %v164 = vadd.f32 %v54, %v158
    %165 = vst [vmem:[#allocation2] sm:$0xff] %v161
    %166 = vst [vmem:[#allocation2 + $0x8] sm:$0xff] %v162
    %167 = vst [vmem:[#allocation2 + $0x10] sm:$0xff] %v163
    %168 = vst [vmem:[#allocation2 + $0x18] sm:$0xff] %v164
    // Predicated region
    $region26: #{tpu_custom_call.1} parent=1 // pred_check
      %p169 = pneg %p43
    $region27: #{tpu_custom_call.1} parent=1 // pred_check_branch
      %171 = sbr.rel (%p169) target = $region29
    $region28: #{tpu_custom_call.1} parent=1 // pred_region
      %v172 = vld [vmem:[#allocation2] sm:$0xff]
      %v173 = vld [vmem:[#allocation2 + $0x8] sm:$0xff]
      %v174 = vld [vmem:[#allocation2 + $0x10] sm:$0xff]
      %v175 = vld [vmem:[#allocation2 + $0x18] sm:$0xff]
      %v176 = vld [vmem:[%s2] sm:$0x1]
      %v178 = vlaneseq
      %v179 = vshrl.u32 %v178, 7
      %v180 = vsub.s32 0, %v179
      %v181 = vrot.slane %v176, %v180
      %v183 = vadd.f32 %v172, %v181
      %v184 = vadd.f32 %v173, %v181
      %v185 = vadd.f32 %v174, %v181
      %v186 = vadd.f32 %v175, %v181
      %187 = vst [vmem:[#allocation8] sm:$0xff] %v183
      %188 = vst [vmem:[#allocation8 + $0x8] sm:$0xff] %v184
      %189 = vst [vmem:[#allocation8 + $0x10] sm:$0xff] %v185
      %190 = vst [vmem:[#allocation8 + $0x18] sm:$0xff] %v186
    $region29: #{tpu_custom_call.1} parent=1 // pred_fallthru
      _
    // Predicated region
    $region30: #{tpu_custom_call.1} parent=1 // pred_check
      _
    $region31: #{tpu_custom_call.1} parent=1 // pred_check_branch
      %192 = sbr.rel (0) target = $region33
    $region32: #{tpu_custom_call.1} parent=1 // pred_region
      %s194 = ssub.s32 512, 512
      %195 = vsyncadd [#allocation5], %s194
      %s196 = sshll.u32 [#allocation8], 4
      %s197 = int_to_ptr.vmem [resolvable:$true] %s196
      %202 = dma.vmem_to_hbm [thread:$0]  %s197, 512, %s3, [#allocation5], 128, 128, 8
    $region33: #{tpu_custom_call.1} parent=1 // pred_fallthru
      _
    // Predicated region
    $region34: #{tpu_custom_call.1} parent=1 // pred_check
      _
    $region35: #{tpu_custom_call.1} parent=1 // pred_check_branch
      %204 = sbr.rel (0) target = $region37
    $region36: #{tpu_custom_call.1} parent=1 // pred_region
      %205 = dma.done [#allocation5], 512
    $region37: #{tpu_custom_call.1} parent=1 // pred_fallthru
      _
    %206 = vsyncpa [#allocation4], 1
    %207 = vsyncpa [#allocation7], 1
    %208 = vsyncpa [#allocation5], 1

</llo_original>
